<compile_context>
chip_gen: v5e
topology: v5e:2x2
jax: 0.10.0
libtpu: 0.0.40
codegen_flags: <defaults>
</compile_context>

<pallas_src>
import jax
import jax.numpy as jnp
import numpy as np
from jax.experimental import pallas as pl
from jax.experimental.pallas import tpu as pltpu

# Configuration: st_gcn_block(in_channels=8, out_channels=16, kernel_size=(3, 3), stride=1)
N, CIN, COUT = 2, 8, 16
T, V = 8, 16
KT, K = 3, 3                   # temporal kernel size, spatial (graph) kernel size
PAD = (KT - 1) // 2
TV = T * V                     # 128 lanes
EPS = 1e-5                     # PyTorch BatchNorm2d default eps


def _st_gcn_kernel(x_ref, wg_ref, m_ref, h1_ref, wtr_ref, hsum_ref, o_ref):
    # x_ref: (CIN, TV) one batch element; channels on sublanes, t*V+v on lanes.
    x = x_ref[...]                                                     # (8, 128) f32

    # ---- GCN 1x1 conv (BN1 scale pre-folded into the weight rows) ----
    y = jnp.dot(wg_ref[...], x, preferred_element_type=jnp.float32)   # (48, 128)

    # ---- GCN graph aggregation: K taps fused into one matmul ----
    # ycat[c, k*TV + l] = y[k*COUT + c, l];  m_ref = vstack_k kron(I_T, A[k]) (bf16)
    ycat = jnp.concatenate([y[k * COUT:(k + 1) * COUT, :] for k in range(K)],
                           axis=1)                                     # (16, 384)
    g = jnp.dot(ycat.astype(jnp.bfloat16), m_ref[...],
                preferred_element_type=jnp.float32)                    # (16, 128)

    # ---- BN1 (folded shift incl. gcn bias pushed through A) + ReLU ----
    h = jnp.maximum(g + h1_ref[...], 0.0)                              # (16, 128)

    # ---- temporal +/-1 shifts as lane shifts by V with explicit zero padding ----
    zpad = jnp.zeros((COUT, V), jnp.float32)
    h_m1 = jnp.concatenate([zpad, h[:, :TV - V]], axis=1)              # h[:, t-1, :]
    h_p1 = jnp.concatenate([h[:, V:], zpad], axis=1)                   # h[:, t+1, :]

    # ---- TCN (KT taps, BN2 scale folded) + residual conv (BNr scale folded):
    #      one fused matmul.  hcat rows = [dt=0 | dt=1 | dt=2 | residual x]
    hcat = jnp.concatenate([h_m1, h, h_p1, x], axis=0)                 # (56, 128)
    out = jnp.dot(wtr_ref[...], hcat, preferred_element_type=jnp.float32)  # (16, 128)

    # ---- BN2 + BNres shifts (conv biases folded) + final ReLU ----
    o_ref[...] = jnp.maximum(out + hsum_ref[...], 0.0)


@jax.jit
def st_gcn_block_forward(x_nchw, A, params):
    """x_nchw: (N, CIN, T, V); A: (K, V, V).  Returns (out (N, COUT, T, V), A)."""

    # Fold eval-mode BatchNorm (and preceding conv bias) into per-channel scale/shift.
    def bn_fold(gamma, beta, mean, var, extra_bias=None):
        s = gamma / jnp.sqrt(var + EPS)
        h = beta - s * mean
        if extra_bias is not None:
            h = h + s * extra_bias
        return s, h

    s1, h1 = bn_fold(params['bn1_g'], params['bn1_b'], params['bn1_m'], params['bn1_v'])
    s2, h2 = bn_fold(params['bn2_g'], params['bn2_b'], params['bn2_m'], params['bn2_v'],
                     extra_bias=params['bt'])
    sr, hr = bn_fold(params['bnr_g'], params['bnr_b'], params['bnr_m'], params['bnr_v'],
                     extra_bias=params['br'])

    # Channels-on-sublanes / (t*V+v)-on-lanes: pure reshape, no transpose.
    x2 = x_nchw.reshape(N, CIN, TV)

    # GCN conv weight with BN1 scale folded in (scale depends only on c = row % COUT).
    wg_s = (params['Wg'].reshape(K, COUT, CIN) * s1[None, :, None]).reshape(K * COUT, CIN)

    # BN1 shift plus the gcn-conv bias pushed through the aggregation:
    #   bias_agg[c, w] = sum_k bg[k, c] * sum_v A[k, v, w]   (independent of t)
    bias_agg = jnp.einsum('kc,kw->cw', params['bg'].reshape(K, COUT), A.sum(axis=1))
    h1_map = jnp.tile(h1[:, None] + s1[:, None] * bias_agg, (1, T))    # (COUT, TV)

    # Stacked graph-aggregation operator (block-diag kron over time), bf16 to halve DMA.
    mstack = jnp.concatenate(
        [jnp.kron(jnp.eye(T, dtype=A.dtype), A[k]) for k in range(K)], axis=0
    ).astype(jnp.bfloat16)                                             # (K*TV, TV)

    # Temporal conv taps (BN2 scale folded) and residual conv (BNr scale folded),
    # concatenated into a single LHS so TCN + residual is one matmul.
    wt_cat = jnp.transpose(params['Wt'], (0, 2, 1)).reshape(COUT, KT * COUT) * s2[:, None]
    wr_s = params['Wr'] * sr[:, None]
    wtr = jnp.concatenate([wt_cat, wr_s], axis=1)                      # (COUT, KT*COUT+CIN)

    hsum = (h2 + hr)[:, None]                                          # (COUT, 1)

    out2 = pl.pallas_call(
        _st_gcn_kernel,
        out_shape=jax.ShapeDtypeStruct((N, COUT, TV), jnp.float32),
        grid_spec=pltpu.PrefetchScalarGridSpec(
            num_scalar_prefetch=0,
            grid=(N,),
            in_specs=[
                pl.BlockSpec((pl.Squeezed(), CIN, TV), lambda n: (n, 0, 0)),   # x
                pl.BlockSpec((K * COUT, CIN), lambda n: (0, 0)),               # gcn W (s1-scaled)
                pl.BlockSpec((K * TV, TV), lambda n: (0, 0)),                  # stacked kron(I_T, A[k]) bf16
                pl.BlockSpec((COUT, TV), lambda n: (0, 0)),                    # BN1 shift map
                pl.BlockSpec((COUT, KT * COUT + CIN), lambda n: (0, 0)),       # [Wt taps | Wr] scaled
                pl.BlockSpec((COUT, 1), lambda n: (0, 0)),                     # BN2+BNr shift
            ],
            out_specs=pl.BlockSpec((pl.Squeezed(), COUT, TV), lambda n: (n, 0, 0)),
        ),
        compiler_params=pltpu.CompilerParams(dimension_semantics=("parallel",)),
    )(x2, wg_s, mstack, h1_map, wtr, hsum)

    out = out2.reshape(N, COUT, T, V)
    return out, A


def reference_forward(x, A, p):
    """Pure-JAX NCHW reference mirroring the PyTorch module (eval mode)."""
    def bn(y, g, b, m, v):
        return ((y - m[None, :, None, None]) / jnp.sqrt(v[None, :, None, None] + EPS)
                * g[None, :, None, None] + b[None, :, None, None])

    # gcn: 1x1 conv -> view (N, K, COUT, T, V) -> einsum with A
    y = jnp.einsum('oc,nctv->notv', p['Wg'], x) + p['bg'][None, :, None, None]
    y = y.reshape(N, K, COUT, T, V)
    g = jnp.einsum('nkctv,kvw->nctw', y, A)
    # tcn: BN -> ReLU -> temporal conv -> BN -> Dropout(0)
    h = jnp.maximum(bn(g, p['bn1_g'], p['bn1_b'], p['bn1_m'], p['bn1_v']), 0.0)
    hp = jnp.pad(h, ((0, 0), (0, 0), (PAD, PAD), (0, 0)))
    tc = sum(jnp.einsum('oi,nitv->notv', p['Wt'][:, :, dt], hp[:, :, dt:dt + T, :])
             for dt in range(KT))
    tc = bn(tc + p['bt'][None, :, None, None],
            p['bn2_g'], p['bn2_b'], p['bn2_m'], p['bn2_v'])
    # residual: 1x1 conv + BN
    r = jnp.einsum('oi,nitv->notv', p['Wr'], x) + p['br'][None, :, None, None]
    r = bn(r, p['bnr_g'], p['bnr_b'], p['bnr_m'], p['bnr_v'])
    return jnp.maximum(tc + r, 0.0), A


if __name__ == "__main__":
    key = jax.random.PRNGKey(0)
    keys = jax.random.split(key, 20)

    def nrm(k, shape, scale=0.1):
        return scale * jax.random.normal(k, shape, dtype=jnp.float32)

    params = {
        'Wg': nrm(keys[0], (K * COUT, CIN)),     # gcn Conv2d weight (K*COUT, CIN, 1, 1) squeezed
        'bg': nrm(keys[1], (K * COUT,)),
        'Wt': nrm(keys[2], (COUT, COUT, KT)),    # temporal Conv2d weight (COUT, COUT, KT, 1) squeezed
        'bt': nrm(keys[3], (COUT,)),
        'Wr': nrm(keys[4], (COUT, CIN)),         # residual Conv2d weight (COUT, CIN, 1, 1) squeezed
        'br': nrm(keys[5], (COUT,)),
        'bn1_g': 1.0 + nrm(keys[6], (COUT,)), 'bn1_b': nrm(keys[7], (COUT,)),
        'bn1_m': nrm(keys[8], (COUT,)),
        'bn1_v': 0.5 + jax.random.uniform(keys[9], (COUT,), dtype=jnp.float32),
        'bn2_g': 1.0 + nrm(keys[10], (COUT,)), 'bn2_b': nrm(keys[11], (COUT,)),
        'bn2_m': nrm(keys[12], (COUT,)),
        'bn2_v': 0.5 + jax.random.uniform(keys[13], (COUT,), dtype=jnp.float32),
        'bnr_g': 1.0 + nrm(keys[14], (COUT,)), 'bnr_b': nrm(keys[15], (COUT,)),
        'bnr_m': nrm(keys[16], (COUT,)),
        'bnr_v': 0.5 + jax.random.uniform(keys[17], (COUT,), dtype=jnp.float32),
    }
    x = jax.random.normal(keys[18], (N, CIN, T, V), dtype=jnp.float32)
    A = 0.2 * jax.random.normal(keys[19], (K, V, V), dtype=jnp.float32)

    out, A_out = st_gcn_block_forward(x, A, params)
    out = jax.block_until_ready(out)

    ref, _ = reference_forward(x, A, params)
    assert out.shape == (N, COUT, T, V)
    # bf16 is used for the graph-aggregation operand pair -> slightly looser atol.
    np.testing.assert_allclose(np.asarray(out), np.asarray(ref), rtol=2e-2, atol=5e-3)
    assert jnp.array_equal(A_out, A)
    print("KERNEL_OK")
</pallas_src>

<mosaic_0001>
module attributes {stable_mosaic.version = 11 : i64} {
  func.func @_st_gcn_kernel(%arg0: i32, %arg1: memref<1x8x128xf32, #tpu.memory_space<vmem>>, %arg2: memref<48x8xf32, #tpu.memory_space<vmem>>, %arg3: memref<384x128xbf16, #tpu.memory_space<vmem>>, %arg4: memref<16x128xf32, #tpu.memory_space<vmem>>, %arg5: memref<16x56xf32, #tpu.memory_space<vmem>>, %arg6: memref<16x1xf32, #tpu.memory_space<vmem>>, %arg7: memref<1x16x128xf32, #tpu.memory_space<vmem>>) attributes {dimension_semantics = [#tpu.dimension_semantics<parallel>], iteration_bounds = array<i64: 2>, scalar_prefetch = 0 : i64, scratch_operands = 0 : i64, tpu.core_type = #tpu.core_type<tc>, window_params = [{transform_indices = @transform_0, window_bounds = array<i64: 1, 8, 128>}, {pipeline_mode = #tpu.pipeline_mode<synchronous>, transform_indices = @transform_1, window_bounds = array<i64: 48, 8>}, {pipeline_mode = #tpu.pipeline_mode<synchronous>, transform_indices = @transform_2, window_bounds = array<i64: 384, 128>}, {pipeline_mode = #tpu.pipeline_mode<synchronous>, transform_indices = @transform_3, window_bounds = array<i64: 16, 128>}, {pipeline_mode = #tpu.pipeline_mode<synchronous>, transform_indices = @transform_4, window_bounds = array<i64: 16, 56>}, {pipeline_mode = #tpu.pipeline_mode<synchronous>, transform_indices = @transform_5, window_bounds = array<i64: 16, 1>}, {transform_indices = @transform_6, window_bounds = array<i64: 1, 16, 128>}]} {
    %c0 = arith.constant 0 : index
    %c0_0 = arith.constant 0 : index
    %c0_1 = arith.constant 0 : index
    %0 = vector.load %arg1[%c0, %c0_0, %c0_1] : memref<1x8x128xf32, #tpu.memory_space<vmem>>, vector<1x8x128xf32>
    %1 = vector.shape_cast %0 : vector<1x8x128xf32> to vector<8x128xf32>
    %c0_2 = arith.constant 0 : index
    %c0_3 = arith.constant 0 : index
    %2 = vector.load %arg2[%c0_2, %c0_3] : memref<48x8xf32, #tpu.memory_space<vmem>>, vector<48x8xf32>
    %cst = arith.constant dense<0.000000e+00> : vector<48x128xf32>
    %3 = tpu.matmul %2, %1, %cst {dimension_numbers = #tpu.dot_dimension_numbers<[1], [0], [0], [1], [0, 0, 1, 1], [], []>} : vector<48x8xf32>, vector<8x128xf32>, vector<48x128xf32> -> vector<48x128xf32>
    %4 = vector.extract_strided_slice %3 {offsets = [0, 0], sizes = [16, 128], strides = [1, 1]} : vector<48x128xf32> to vector<16x128xf32>
    %5 = vector.extract_strided_slice %3 {offsets = [16, 0], sizes = [16, 128], strides = [1, 1]} : vector<48x128xf32> to vector<16x128xf32>
    %6 = vector.extract_strided_slice %3 {offsets = [32, 0], sizes = [16, 128], strides = [1, 1]} : vector<48x128xf32> to vector<16x128xf32>
    %7 = tpu.concatenate %4, %5, %6 in 1 : vector<16x128xf32>, vector<16x128xf32>, vector<16x128xf32> -> vector<16x384xf32>
    %8 = arith.truncf %7 : vector<16x384xf32> to vector<16x384xbf16>
    %c0_4 = arith.constant 0 : index
    %c0_5 = arith.constant 0 : index
    %9 = vector.load %arg3[%c0_4, %c0_5] : memref<384x128xbf16, #tpu.memory_space<vmem>>, vector<384x128xbf16>
    %cst_6 = arith.constant dense<0.000000e+00> : vector<16x128xf32>
    %10 = tpu.matmul %8, %9, %cst_6 {dimension_numbers = #tpu.dot_dimension_numbers<[1], [0], [0], [1], [0, 0, 1, 1], [], []>} : vector<16x384xbf16>, vector<384x128xbf16>, vector<16x128xf32> -> vector<16x128xf32>
    %c0_7 = arith.constant 0 : index
    %c0_8 = arith.constant 0 : index
    %11 = vector.load %arg4[%c0_7, %c0_8] : memref<16x128xf32, #tpu.memory_space<vmem>>, vector<16x128xf32>
    %12 = arith.addf %10, %11 : vector<16x128xf32>
    %cst_9 = arith.constant 0.000000e+00 : f32
    %13 = vector.broadcast %cst_9 : f32 to vector<16x128xf32>
    %14 = arith.maximumf %12, %13 : vector<16x128xf32>
    %cst_10 = arith.constant 0.000000e+00 : f32
    %15 = vector.broadcast %cst_10 : f32 to vector<16x16xf32>
    %16 = vector.extract_strided_slice %14 {offsets = [0, 0], sizes = [16, 112], strides = [1, 1]} : vector<16x128xf32> to vector<16x112xf32>
    %17 = tpu.concatenate %15, %16 in 1 : vector<16x16xf32>, vector<16x112xf32> -> vector<16x128xf32>
    %18 = vector.extract_strided_slice %14 {offsets = [0, 16], sizes = [16, 112], strides = [1, 1]} : vector<16x128xf32> to vector<16x112xf32>
    %19 = tpu.concatenate %18, %15 in 1 : vector<16x112xf32>, vector<16x16xf32> -> vector<16x128xf32>
    %20 = tpu.concatenate %17, %14, %19, %1 in 0 : vector<16x128xf32>, vector<16x128xf32>, vector<16x128xf32>, vector<8x128xf32> -> vector<56x128xf32>
    %c0_11 = arith.constant 0 : index
    %c0_12 = arith.constant 0 : index
    %21 = vector.load %arg5[%c0_11, %c0_12] : memref<16x56xf32, #tpu.memory_space<vmem>>, vector<16x56xf32>
    %cst_13 = arith.constant dense<0.000000e+00> : vector<16x128xf32>
    %22 = tpu.matmul %21, %20, %cst_13 {dimension_numbers = #tpu.dot_dimension_numbers<[1], [0], [0], [1], [0, 0, 1, 1], [], []>} : vector<16x56xf32>, vector<56x128xf32>, vector<16x128xf32> -> vector<16x128xf32>
    %c0_14 = arith.constant 0 : index
    %c0_15 = arith.constant 0 : index
    %23 = vector.load %arg6[%c0_14, %c0_15] : memref<16x1xf32, #tpu.memory_space<vmem>>, vector<16x1xf32>
    %24 = vector.broadcast %23 : vector<16x1xf32> to vector<16x128xf32>
    %25 = arith.addf %22, %24 : vector<16x128xf32>
    %cst_16 = arith.constant 0.000000e+00 : f32
    %26 = vector.broadcast %cst_16 : f32 to vector<16x128xf32>
    %27 = arith.maximumf %25, %26 : vector<16x128xf32>
    %c0_17 = arith.constant 0 : index
    %c0_18 = arith.constant 0 : index
    %c0_19 = arith.constant 0 : index
    %28 = vector.load %arg7[%c0_17, %c0_18, %c0_19] : memref<1x16x128xf32, #tpu.memory_space<vmem>>, vector<1x16x128xf32>
    %29 = vector.shape_cast %28 : vector<1x16x128xf32> to vector<16x128xf32>
    %30 = vector.shape_cast %27 : vector<16x128xf32> to vector<1x16x128xf32>
    tpu.vector_store %arg7[%c0_17, %c0_18, %c0_19], %30 {strides = array<i32>} : memref<1x16x128xf32, #tpu.memory_space<vmem>>, vector<1x16x128xf32>,
    return
  }
  func.func @transform_0(%arg0: i32) -> (i32, i32, i32) {
    %c0_i32 = arith.constant 0 : i32
    %c0_i32_0 = arith.constant 0 : i32
    %c0_i32_1 = arith.constant 0 : i32
    return %arg0, %c0_i32, %c0_i32_0 : i32, i32, i32
  }
  func.func @transform_1(%arg0: i32) -> (i32, i32) {
    %c0_i32 = arith.constant 0 : i32
    %c0_i32_0 = arith.constant 0 : i32
    %c0_i32_1 = arith.constant 0 : i32
    return %c0_i32, %c0_i32_0 : i32, i32
  }
  func.func @transform_2(%arg0: i32) -> (i32, i32) {
    %c0_i32 = arith.constant 0 : i32
    %c0_i32_0 = arith.constant 0 : i32
    %c0_i32_1 = arith.constant 0 : i32
    return %c0_i32, %c0_i32_0 : i32, i32
  }
  func.func @transform_3(%arg0: i32) -> (i32, i32) {
    %c0_i32 = arith.constant 0 : i32
    %c0_i32_0 = arith.constant 0 : i32
    %c0_i32_1 = arith.constant 0 : i32
    return %c0_i32, %c0_i32_0 : i32, i32
  }
  func.func @transform_4(%arg0: i32) -> (i32, i32) {
    %c0_i32 = arith.constant 0 : i32
    %c0_i32_0 = arith.constant 0 : i32
    %c0_i32_1 = arith.constant 0 : i32
    return %c0_i32, %c0_i32_0 : i32, i32
  }
  func.func @transform_5(%arg0: i32) -> (i32, i32) {
    %c0_i32 = arith.constant 0 : i32
    %c0_i32_0 = arith.constant 0 : i32
    %c0_i32_1 = arith.constant 0 : i32
    return %c0_i32, %c0_i32_0 : i32, i32
  }
  func.func @transform_6(%arg0: i32) -> (i32, i32, i32) {
    %c0_i32 = arith.constant 0 : i32
    %c0_i32_0 = arith.constant 0 : i32
    %c0_i32_1 = arith.constant 0 : i32
    return %arg0, %c0_i32, %c0_i32_0 : i32, i32, i32
  }
}

</mosaic_0001>

<llo_original>
// kernel: tile.9
$region0: #{tile.9}
  %s0 = inlined_call_operand.vmem [shape: f32[16,8,16], index: 0, kind: input, shape index: {}]
  %s1 = inlined_call_operand.vmem [shape: f32[16,128], index: 1, kind: output, shape index: {}]
  %v2 = vld [vmem:[%s0] ss:$8 sm:$0xf]
  %v3 = vld [vmem:[%s0] ss:$8 sm:$0xf0]
  %vm4 = vcmask 1047556
  %v5 = vsel %vm4, %v3, %v2
  %vm6 = vcmask 130048
  %7 = vst.msk [vmem:[%s1] sm:$0xff] %vm6, %v5
  %s8 = scalar_lea.vmem %s0, 64
  %v9 = vld [vmem:[%s8] ss:$8 sm:$0xf]
  %s10 = scalar_lea.vmem %s0, 64
  %v11 = vld [vmem:[%s10] ss:$8 sm:$0xf0]
  %vm12 = vcmask 1047556
  %v13 = vsel %vm12, %v11, %v9
  %vm14 = vcmask 130048
  %s15 = scalar_lea.vmem %s1, 8
  %16 = vst.msk [vmem:[%s15] sm:$0xff] %vm14, %v13
  %s17 = scalar_lea.vmem %s0, 7
  %v18 = vld [vmem:[%s17] ss:$8 sm:$0xf]
  %s19 = scalar_lea.vmem %s0, 7
  %v20 = vld [vmem:[%s19] ss:$8 sm:$0xf0]
  %vm21 = vcmask 1047556
  %v22 = vsel %vm21, %v20, %v18
  %23 = vrot.lane.b32.xlu0 %v22, 112
  %v24 = vpop.permute.xlu0 %23
  %vm25 = vcmask 1048448
  %26 = vst.msk [vmem:[%s1] sm:$0xff] %vm25, %v24
  %s27 = scalar_lea.vmem %s0, 71
  %v28 = vld [vmem:[%s27] ss:$8 sm:$0xf]
  %s29 = scalar_lea.vmem %s0, 71
  %v30 = vld [vmem:[%s29] ss:$8 sm:$0xf0]
  %vm31 = vcmask 1047556
  %v32 = vsel %vm31, %v30, %v28
  %33 = vrot.lane.b32.xlu0 %v32, 112
  %v34 = vpop.permute.xlu0 %33
  %vm35 = vcmask 1048448
  %s36 = scalar_lea.vmem %s1, 8
  %37 = vst.msk [vmem:[%s36] sm:$0xff] %vm35, %v34
  %s38 = scalar_lea.vmem %s0, 6
  %v39 = vld [vmem:[%s38] ss:$8 sm:$0xf]
  %s40 = scalar_lea.vmem %s0, 6
  %v41 = vld [vmem:[%s40] ss:$8 sm:$0xf0]
  %vm42 = vcmask 1047556
  %v43 = vsel %vm42, %v41, %v39
  %44 = vrot.lane.b32.xlu0 %v43, 96
  %v45 = vpop.permute.xlu0 %44
  %vm46 = vcmask 917248
  %47 = vst.msk [vmem:[%s1] sm:$0xff] %vm46, %v45
  %s48 = scalar_lea.vmem %s0, 70
  %v49 = vld [vmem:[%s48] ss:$8 sm:$0xf]
  %s50 = scalar_lea.vmem %s0, 70
  %v51 = vld [vmem:[%s50] ss:$8 sm:$0xf0]
  %vm52 = vcmask 1047556
  %v53 = vsel %vm52, %v51, %v49
  %54 = vrot.lane.b32.xlu0 %v53, 96
  %v55 = vpop.permute.xlu0 %54
  %vm56 = vcmask 917248
  %s57 = scalar_lea.vmem %s1, 8
  %58 = vst.msk [vmem:[%s57] sm:$0xff] %vm56, %v55
  %s59 = scalar_lea.vmem %s0, 5
  %v60 = vld [vmem:[%s59] ss:$8 sm:$0xf]
  %s61 = scalar_lea.vmem %s0, 5
  %v62 = vld [vmem:[%s61] ss:$8 sm:$0xf0]
  %vm63 = vcmask 1047556
  %v64 = vsel %vm63, %v62, %v60
  %65 = vrot.lane.b32.xlu0 %v64, 80
  %v66 = vpop.permute.xlu0 %65
  %vm67 = vcmask 786048
  %68 = vst.msk [vmem:[%s1] sm:$0xff] %vm67, %v66
  %s69 = scalar_lea.vmem %s0, 69
  %v70 = vld [vmem:[%s69] ss:$8 sm:$0xf]
  %s71 = scalar_lea.vmem %s0, 69
  %v72 = vld [vmem:[%s71] ss:$8 sm:$0xf0]
  %vm73 = vcmask 1047556
  %v74 = vsel %vm73, %v72, %v70
  %75 = vrot.lane.b32.xlu0 %v74, 80
  %v76 = vpop.permute.xlu0 %75
  %vm77 = vcmask 786048
  %s78 = scalar_lea.vmem %s1, 8
  %79 = vst.msk [vmem:[%s78] sm:$0xff] %vm77, %v76
  %s80 = scalar_lea.vmem %s0, 4
  %v81 = vld [vmem:[%s80] ss:$8 sm:$0xf]
  %s82 = scalar_lea.vmem %s0, 4
  %v83 = vld [vmem:[%s82] ss:$8 sm:$0xf0]
  %vm84 = vcmask 1047556
  %v85 = vsel %vm84, %v83, %v81
  %86 = vrot.lane.b32.xlu0 %v85, 64
  %v87 = vpop.permute.xlu0 %86
  %vm88 = vcmask 654848
  %89 = vst.msk [vmem:[%s1] sm:$0xff] %vm88, %v87
  %s90 = scalar_lea.vmem %s0, 68
  %v91 = vld [vmem:[%s90] ss:$8 sm:$0xf]
  %s92 = scalar_lea.vmem %s0, 68
  %v93 = vld [vmem:[%s92] ss:$8 sm:$0xf0]
  %vm94 = vcmask 1047556
  %v95 = vsel %vm94, %v93, %v91
  %96 = vrot.lane.b32.xlu0 %v95, 64
  %v97 = vpop.permute.xlu0 %96
  %vm98 = vcmask 654848
  %s99 = scalar_lea.vmem %s1, 8
  %100 = vst.msk [vmem:[%s99] sm:$0xff] %vm98, %v97
  %s101 = scalar_lea.vmem %s0, 3
  %v102 = vld [vmem:[%s101] ss:$8 sm:$0xf]
  %s103 = scalar_lea.vmem %s0, 3
  %v104 = vld [vmem:[%s103] ss:$8 sm:$0xf0]
  %vm105 = vcmask 1047556
  %v106 = vsel %vm105, %v104, %v102
  %107 = vrot.lane.b32.xlu0 %v106, 48
  %v108 = vpop.permute.xlu0 %107
  %vm109 = vcmask 523648
  %110 = vst.msk [vmem:[%s1] sm:$0xff] %vm109, %v108
  %s111 = scalar_lea.vmem %s0, 67
  %v112 = vld [vmem:[%s111] ss:$8 sm:$0xf]
  %s113 = scalar_lea.vmem %s0, 67
  %v114 = vld [vmem:[%s113] ss:$8 sm:$0xf0]
  %vm115 = vcmask 1047556
  %v116 = vsel %vm115, %v114, %v112
  %117 = vrot.lane.b32.xlu0 %v116, 48
  %v118 = vpop.permute.xlu0 %117
  %vm119 = vcmask 523648
  %s120 = scalar_lea.vmem %s1, 8
  %121 = vst.msk [vmem:[%s120] sm:$0xff] %vm119, %v118
  %s122 = scalar_lea.vmem %s0, 2
  %v123 = vld [vmem:[%s122] ss:$8 sm:$0xf]
  %s124 = scalar_lea.vmem %s0, 2
  %v125 = vld [vmem:[%s124] ss:$8 sm:$0xf0]
  %vm126 = vcmask 1047556
  %v127 = vsel %vm126, %v125, %v123
  %128 = vrot.lane.b32.xlu0 %v127, 32
  %v129 = vpop.permute.xlu0 %128
  %vm130 = vcmask 392448
  %131 = vst.msk [vmem:[%s1] sm:$0xff] %vm130, %v129
  %s132 = scalar_lea.vmem %s0, 66
  %v133 = vld [vmem:[%s132] ss:$8 sm:$0xf]
  %s134 = scalar_lea.vmem %s0, 66
  %v135 = vld [vmem:[%s134] ss:$8 sm:$0xf0]
  %vm136 = vcmask 1047556
  %v137 = vsel %vm136, %v135, %v133
  %138 = vrot.lane.b32.xlu0 %v137, 32
  %v139 = vpop.permute.xlu0 %138
  %vm140 = vcmask 392448
  %s141 = scalar_lea.vmem %s1, 8
  %142 = vst.msk [vmem:[%s141] sm:$0xff] %vm140, %v139
  %s143 = scalar_lea.vmem %s0, 1
  %v144 = vld [vmem:[%s143] ss:$8 sm:$0xf]
  %s145 = scalar_lea.vmem %s0, 1
  %v146 = vld [vmem:[%s145] ss:$8 sm:$0xf0]
  %vm147 = vcmask 1047556
  %v148 = vsel %vm147, %v146, %v144
  %149 = vrot.lane.b32.xlu0 %v148, 16
  %v150 = vpop.permute.xlu0 %149
  %vm151 = vcmask 261248
  %152 = vst.msk [vmem:[%s1] sm:$0xff] %vm151, %v150
  %s153 = scalar_lea.vmem %s0, 65
  %v154 = vld [vmem:[%s153] ss:$8 sm:$0xf]
  %s155 = scalar_lea.vmem %s0, 65
  %v156 = vld [vmem:[%s155] ss:$8 sm:$0xf0]
  %vm157 = vcmask 1047556
  %v158 = vsel %vm157, %v156, %v154
  %159 = vrot.lane.b32.xlu0 %v158, 16
  %v160 = vpop.permute.xlu0 %159
  %vm161 = vcmask 261248
  %s162 = scalar_lea.vmem %s1, 8
  %163 = vst.msk [vmem:[%s162] sm:$0xff] %vm161, %v160

// kernel: st_gcn_block_forward.1
$region0: #{st_gcn_block_forward.1}
  #allocation0 [shape = 'u32[]', space=smem, size = 0x4, offset = 0x4, fixed_abs, tag = 'smem constant byte address 0x4 - core index']
  #allocation1 [shape = 'u32[72,128]{1,0:T(1,128)}', space=vmem, size = 0x9000, scoped, tag = 'internal scratch']
  %s0 = inlined_call_operand.vmem [shape: f32[2,8,128], index: 0, kind: input, shape index: {}]
  %s1 = inlined_call_operand.vmem [shape: f32[48,8], index: 1, kind: input, shape index: {}]
  %s2 = inlined_call_operand.vmem [shape: bf16[384,128], index: 2, kind: input, shape index: {}]
  %s3 = inlined_call_operand.vmem [shape: f32[16,128], index: 3, kind: input, shape index: {}]
  %s4 = inlined_call_operand.vmem [shape: f32[16,56], index: 4, kind: input, shape index: {}]
  %s5 = inlined_call_operand.vmem [shape: f32[16,1], index: 5, kind: input, shape index: {}]
  %s6 = inlined_call_operand.vmem [shape: f32[2,16,128], index: 6, kind: output, shape index: {}]
  %s7 = sld [smem:[#allocation0]]
  $region57: #{st_gcn_block_forward.1} parent=0
    _
  %s9 = ssub.s32 1, %s7
  %s10 = scalar_select 0, %s9, %s7
  loop: start=0, step=1, limit=4
  $region2: #{st_gcn_block_forward.1} parent=0 // loop_pre_header
    _
  $region3: #{st_gcn_block_forward.1} parent=0 // loop_header
    %s12 = sphi 0, %s16
    %p13 = scmp.ge.s32.totalorder %s12, 4
    %s22 = sphi 0, %s24
    %s25 = sphi 0, %s22
    %s26 = sphi 0, %s25
    %s42 = sphi 0, %s26
    %s46 = sphi 0, %s46
    %s48 = sphi 0, %s46
    %s49 = sphi 0, %s48
    %s63 = sphi 0, %s49
    %s67 = sphi 0, %s67
    %s69 = sphi 0, %s67
    %s70 = sphi 0, %s69
    %s84 = sphi 0, %s70
    %s88 = sphi 0, %s88
    %s90 = sphi 0, %s88
    %s91 = sphi 0, %s90
    %s105 = sphi 0, %s91
    %s109 = sphi 0, %s109
    %s111 = sphi 0, %s109
    %s112 = sphi 0, %s111
    %s126 = sphi 0, %s112
    %s130 = sphi 0, %s130
    %s132 = sphi 0, %s130
    %s133 = sphi 0, %s132
    %s147 = sphi 0, %s133
    %s153 = sphi 0, %s155
    %s156 = sphi 0, %s153
    %s157 = sphi 0, %s156
    %s173 = sphi 0, %s157
  $region4: #{st_gcn_block_forward.1} parent=0 // loop_header_branch
    %15 = sbr.rel (%p13) target = $region8
  $region5: #{st_gcn_block_forward.1} parent=0 // loop_body
    %s17 = ssub.s32 %s12, 1
    %s18 = ssub.s32 %s12, 2
    %s19 = sadd.s32 %s12, 1
    %s20 = ssub.s32 %s12, %s19
    %p21 = scmp.eq.s32.totalorder %s20, 0
    %s23 = sadd.s32 %s22, 1
    %s24 = scalar_select %p21, %s22, %s23
    %p27 = pneg %p21
    %p28 = scmp.eq.s32.totalorder %s12, 1
    %p29 = por %p27, %p28
    %p30 = scmp.ne.s32.totalorder %s22, %s25
    %p31 = scmp.eq.s32.totalorder %s12, 0
    %p32 = por %p30, %p31
    %p33 = scmp.ne.s32.totalorder %s22, %s25
    %p34 = scmp.eq.s32.totalorder %s17, 1
    %p35 = por %p33, %p34
    %p36 = scmp.ne.s32.totalorder %s25, %s26
    %p37 = scmp.eq.s32.totalorder %s17, 0
    %p38 = por %p36, %p37
    %p39 = scmp.ne.s32.totalorder %s25, %s26
    %p40 = scmp.eq.s32.totalorder %s18, 1
    %p41 = por %p39, %p40
    %p43 = scmp.ne.s32.totalorder %s26, %s42
    %p44 = scmp.eq.s32.totalorder %s18, 0
    %p45 = por %p43, %p44
    %s47 = sadd.s32 %s46, 1
    %p50 = scmp.eq.s32.totalorder %s12, 1
    %p51 = scmp.ne.s32.totalorder %s46, %s48
    %p52 = scmp.eq.s32.totalorder %s12, 0
    %p53 = por %p51, %p52
    %p54 = scmp.ne.s32.totalorder %s46, %s48
    %p55 = scmp.eq.s32.totalorder %s17, 1
    %p56 = por %p54, %p55
    %p57 = scmp.ne.s32.totalorder %s48, %s49
    %p58 = scmp.eq.s32.totalorder %s17, 0
    %p59 = por %p57, %p58
    %p60 = scmp.ne.s32.totalorder %s48, %s49
    %p61 = scmp.eq.s32.totalorder %s18, 1
    %p62 = por %p60, %p61
    %p64 = scmp.ne.s32.totalorder %s49, %s63
    %p65 = scmp.eq.s32.totalorder %s18, 0
    %p66 = por %p64, %p65
    %s68 = sadd.s32 %s67, 1
    %p71 = scmp.eq.s32.totalorder %s12, 1
    %p72 = scmp.ne.s32.totalorder %s67, %s69
    %p73 = scmp.eq.s32.totalorder %s12, 0
    %p74 = por %p72, %p73
    %p75 = scmp.ne.s32.totalorder %s67, %s69
    %p76 = scmp.eq.s32.totalorder %s17, 1
    %p77 = por %p75, %p76
    %p78 = scmp.ne.s32.totalorder %s69, %s70
    %p79 = scmp.eq.s32.totalorder %s17, 0
    %p80 = por %p78, %p79
    %p81 = scmp.ne.s32.totalorder %s69, %s70
    %p82 = scmp.eq.s32.totalorder %s18, 1
    %p83 = por %p81, %p82
    %p85 = scmp.ne.s32.totalorder %s70, %s84
    %p86 = scmp.eq.s32.totalorder %s18, 0
    %p87 = por %p85, %p86
    %s89 = sadd.s32 %s88, 1
    %p92 = scmp.eq.s32.totalorder %s12, 1
    %p93 = scmp.ne.s32.totalorder %s88, %s90
    %p94 = scmp.eq.s32.totalorder %s12, 0
    %p95 = por %p93, %p94
    %p96 = scmp.ne.s32.totalorder %s88, %s90
    %p97 = scmp.eq.s32.totalorder %s17, 1
    %p98 = por %p96, %p97
    %p99 = scmp.ne.s32.totalorder %s90, %s91
    %p100 = scmp.eq.s32.totalorder %s17, 0
    %p101 = por %p99, %p100
    %p102 = scmp.ne.s32.totalorder %s90, %s91
    %p103 = scmp.eq.s32.totalorder %s18, 1
    %p104 = por %p102, %p103
    %p106 = scmp.ne.s32.totalorder %s91, %s105
    %p107 = scmp.eq.s32.totalorder %s18, 0
    %p108 = por %p106, %p107
    %s110 = sadd.s32 %s109, 1
    %p113 = scmp.eq.s32.totalorder %s12, 1
    %p114 = scmp.ne.s32.totalorder %s109, %s111
    %p115 = scmp.eq.s32.totalorder %s12, 0
    %p116 = por %p114, %p115
    %p117 = scmp.ne.s32.totalorder %s109, %s111
    %p118 = scmp.eq.s32.totalorder %s17, 1
    %p119 = por %p117, %p118
    %p120 = scmp.ne.s32.totalorder %s111, %s112
    %p121 = scmp.eq.s32.totalorder %s17, 0
    %p122 = por %p120, %p121
    %p123 = scmp.ne.s32.totalorder %s111, %s112
    %p124 = scmp.eq.s32.totalorder %s18, 1
    %p125 = por %p123, %p124
    %p127 = scmp.ne.s32.totalorder %s112, %s126
    %p128 = scmp.eq.s32.totalorder %s18, 0
    %p129 = por %p127, %p128
    %s131 = sadd.s32 %s130, 1
    %p134 = scmp.eq.s32.totalorder %s12, 1
    %p135 = scmp.ne.s32.totalorder %s130, %s132
    %p136 = scmp.eq.s32.totalorder %s12, 0
    %p137 = por %p135, %p136
    %p138 = scmp.ne.s32.totalorder %s130, %s132
    %p139 = scmp.eq.s32.totalorder %s17, 1
    %p140 = por %p138, %p139
    %p141 = scmp.ne.s32.totalorder %s132, %s133
    %p142 = scmp.eq.s32.totalorder %s17, 0
    %p143 = por %p141, %p142
    %p144 = scmp.ne.s32.totalorder %s132, %s133
    %p145 = scmp.eq.s32.totalorder %s18, 1
    %p146 = por %p144, %p145
    %p148 = scmp.ne.s32.totalorder %s133, %s147
    %p149 = scmp.eq.s32.totalorder %s18, 0
    %p150 = por %p148, %p149
    %s151 = ssub.s32 %s12, %s19
    %p152 = scmp.eq.s32.totalorder %s151, 0
    %s154 = sadd.s32 %s153, 1
    %s155 = scalar_select %p152, %s153, %s154
    %p158 = pneg %p152
    %p159 = scmp.eq.s32.totalorder %s12, 1
    %p160 = por %p158, %p159
    %p161 = scmp.ne.s32.totalorder %s153, %s156
    %p162 = scmp.eq.s32.totalorder %s12, 0
    %p163 = por %p161, %p162
    %p164 = scmp.ne.s32.totalorder %s153, %s156
    %p165 = scmp.eq.s32.totalorder %s17, 1
    %p166 = por %p164, %p165
    %p167 = scmp.ne.s32.totalorder %s156, %s157
    %p168 = scmp.eq.s32.totalorder %s17, 0
    %p169 = por %p167, %p168
    %p170 = scmp.ne.s32.totalorder %s156, %s157
    %p171 = scmp.eq.s32.totalorder %s18, 1
    %p172 = por %p170, %p171
    %p174 = scmp.ne.s32.totalorder %s157, %s173
    %p175 = scmp.eq.s32.totalorder %s18, 0
    %p176 = por %p174, %p175
    %p177 = scmp.le.s32.totalorder 1, %s12
    %p178 = scmp.lt.s32.totalorder %s12, 3
    %p179 = pnand %p177, %p178
    %p180 = pneg %p179
    // Predicated region
    $region9: #{st_gcn_block_forward.1} parent=5 // pred_check
      _
    $region10: #{st_gcn_block_forward.1} parent=5 // pred_check_branch
      %182 = sbr.rel (%p179) target = $region12
    $region11: #{st_gcn_block_forward.1} parent=5 // pred_region
      %s183 = ssub.s32 %s12, 1
      // Predicated region
      $region13: #{st_gcn_block_forward.1} parent=11 // pred_check
        %p184 = pneg %p59
      $region14: #{st_gcn_block_forward.1} parent=11 // pred_check_branch
        %186 = sbr.rel (%p184) target = $region16
      $region15: #{st_gcn_block_forward.1} parent=11 // pred_region
        _
      $region16: #{st_gcn_block_forward.1} parent=11 // pred_fallthru
        _
      // Predicated region
      $region17: #{st_gcn_block_forward.1} parent=11 // pred_check
        %p187 = pneg %p80
      $region18: #{st_gcn_block_forward.1} parent=11 // pred_check_branch
        %189 = sbr.rel (%p187) target = $region20
      $region19: #{st_gcn_block_forward.1} parent=11 // pred_region
        _
      $region20: #{st_gcn_block_forward.1} parent=11 // pred_fallthru
        _
      // Predicated region
      $region21: #{st_gcn_block_forward.1} parent=11 // pred_check
        %p190 = pneg %p101
      $region22: #{st_gcn_block_forward.1} parent=11 // pred_check_branch
        %192 = sbr.rel (%p190) target = $region24
      $region23: #{st_gcn_block_forward.1} parent=11 // pred_region
        _
      $region24: #{st_gcn_block_forward.1} parent=11 // pred_fallthru
        _
      // Predicated region
      $region25: #{st_gcn_block_forward.1} parent=11 // pred_check
        %p193 = pneg %p122
      $region26: #{st_gcn_block_forward.1} parent=11 // pred_check_branch
        %195 = sbr.rel (%p193) target = $region28
      $region27: #{st_gcn_block_forward.1} parent=11 // pred_region
        _
      $region28: #{st_gcn_block_forward.1} parent=11 // pred_fallthru
        _
      // Predicated region
      $region29: #{st_gcn_block_forward.1} parent=11 // pred_check
        %p196 = pneg %p143
      $region30: #{st_gcn_block_forward.1} parent=11 // pred_check_branch
        %198 = sbr.rel (%p196) target = $region32
      $region31: #{st_gcn_block_forward.1} parent=11 // pred_region
        _
      $region32: #{st_gcn_block_forward.1} parent=11 // pred_fallthru
        _
    $region12: #{st_gcn_block_forward.1} parent=5 // pred_fallthru
      _
    %p199 = scmp.lt.s32.totalorder %s12, 2
    // Predicated region
    $region33: #{st_gcn_block_forward.1} parent=5 // pred_check
      %p200 = pneg %p199
    $region34: #{st_gcn_block_forward.1} parent=5 // pred_check_branch
      %202 = sbr.rel (%p200) target = $region36
    $region35: #{st_gcn_block_forward.1} parent=5 // pred_region
      // Predicated region
      $region37: #{st_gcn_block_forward.1} parent=35 // pred_check
        %p203 = pneg %p32
      $region38: #{st_gcn_block_forward.1} parent=35 // pred_check_branch
        %205 = sbr.rel (%p203) target = $region40
      $region39: #{st_gcn_block_forward.1} parent=35 // pred_region
        %p206 = scmp.lt.s32.totalorder %s12, 1
        %s207 = scalar_select %p206, %s12, 1
        %s208 = smul.addr %s207, 8
        %s209 = scalar_lea.vmem %s0, %s208
      $region40: #{st_gcn_block_forward.1} parent=35 // pred_fallthru
        _
    $region36: #{st_gcn_block_forward.1} parent=5 // pred_fallthru
      _
    %p210 = scmp.le.s32.totalorder 1, %s12
    %p211 = scmp.lt.s32.totalorder %s12, 3
    %p212 = pnand %p210, %p211
    %p213 = pneg %p212
    // Predicated region
    $region41: #{st_gcn_block_forward.1} parent=5 // pred_check
      _
    $region42: #{st_gcn_block_forward.1} parent=5 // pred_check_branch
      %215 = sbr.rel (%p212) target = $region44
    $region43: #{st_gcn_block_forward.1} parent=5 // pred_region
      %s216 = ssub.s32 %s12, 1
      %p217 = scmp.lt.s32.totalorder %s17, 1
      %s218 = scalar_select %p217, %s17, 1
      %s219 = smul.addr %s218, 8
      %s220 = scalar_lea.vmem %s0, %s219
      %p221 = pneg %p38
      %p222 = pneg %p35
      %p223 = pneg %p59
      %p224 = pneg %p56
      %p225 = pneg %p80
      %p226 = pneg %p77
      %p227 = pneg %p101
      %p228 = pneg %p98
      %p229 = pneg %p122
      %p230 = pneg %p119
      %p231 = pneg %p143
      %p232 = pneg %p140
      %p233 = pneg %p169
      %p234 = pneg %p166
      %p235 = scmp.lt.s32.totalorder %s17, 1
      %s236 = scalar_select %p235, %s17, 1
      %s237 = smul.addr %s236, 2
      %s238 = smul.addr %s237, 8
      %s239 = scalar_lea.vmem %s6, %s238
      %p240 = scmp.lt.s32.totalorder %s17, 1
      %s241 = scalar_select %p240, %s17, 1
      %s242 = smul.addr %s241, 8
      %s243 = scalar_lea.vmem %s0, %s242
      %p244 = scmp.lt.s32.totalorder %s17, 1
      %s245 = scalar_select %p244, %s17, 1
      %s246 = smul.addr %s245, 2
      %s247 = smul.addr %s246, 8
      %s248 = scalar_lea.vmem %s6, %s247
      %v249 = vld [vmem:[%s243] sm:$0xff]
      %v250 = vld [vmem:[%s1] sm:$0xff]
      %v251 = vld [vmem:[%s1 + $0x8] sm:$0xff]
      %v252 = vld [vmem:[%s1 + $0x10] sm:$0xff]
      %v253 = vld [vmem:[%s1 + $0x18] sm:$0xff]
      %v254 = vld [vmem:[%s1 + $0x20] sm:$0xff]
      %v255 = vld [vmem:[%s1 + $0x28] sm:$0xff]
      %vm256 = vcmask 64512
      %v258 = vsel %vm256, %v250, 0
      %v261 = vsel %vm256, %v251, 0
      %v264 = vsel %vm256, %v252, 0
      %v267 = vsel %vm256, %v253, 0
      %v270 = vsel %vm256, %v254, 0
      %v273 = vsel %vm256, %v255, 0
      %275 = vmatpush.msra.mxu0 0.0
      %276 = vmatpush.msra.mxu0 0.0
      %277 = vmatpush.msra.mxu0 0.0
      %278 = vmatpush.msra.mxu0 0.0
      %279 = vmatpush.msra.mxu0 0.0
      %280 = vmatpush.msra.mxu0 0.0
      %281 = vmatpush.msra.mxu0 0.0
      %282 = vmatpush.msra.mxu0 0.0
      %283 = vmatpush.msra.mxu0 0.0
      %284 = vmatpush.msra.mxu0 0.0
      %285 = vmatpush.msra.mxu0 0.0
      %286 = vmatpush.msra.mxu0 0.0
      %287 = vmatpush.msra.mxu0 0.0
      %288 = vmatpush.msra.mxu0 0.0
      %289 = vmatpush.msra.mxu0 0.0
      %290 = vmatpush.msra.mxu0 %v249
      %291 = vmatmul.f32.gmra.mxu0 %v258
      %v292 = vpop.f32.mrf.mxu0
      %v293 = vadd.f32 0.0, %v292
      %294 = vmatmul.f32.gmra.mxu0 %v261
      %v295 = vpop.f32.mrf.mxu0
      %v296 = vadd.f32 0.0, %v295
      %297 = vmatmul.f32.gmra.mxu0 %v264
      %v298 = vpop.f32.mrf.mxu0
      %v299 = vadd.f32 0.0, %v298
      %300 = vmatmul.f32.gmra.mxu0 %v267
      %v301 = vpop.f32.mrf.mxu0
      %v302 = vadd.f32 0.0, %v301
      %303 = vmatmul.f32.gmra.mxu0 %v270
      %v304 = vpop.f32.mrf.mxu0
      %v305 = vadd.f32 0.0, %v304
      %306 = vmatmul.f32.gmra.mxu0 %v273
      %v307 = vpop.f32.mrf.mxu0
      %v308 = vadd.f32 0.0, %v307
      %309 = vdwg.mxu0
      %v310 = vpack.c.bf16 %v296, %v293
      %v311 = vpack.c.bf16 %v302, %v299
      %v312 = vpack.c.bf16 %v308, %v305
      %v313 = vld [vmem:[%s2] sm:$0xf]
      %v314 = vld [vmem:[%s2 + $0x4] sm:$0xf]
      %v315 = vld [vmem:[%s2 + $0x8] sm:$0xf]
      %v316 = vld [vmem:[%s2 + $0xc] sm:$0xf]
      %v317 = vld [vmem:[%s2 + $0x10] sm:$0xf]
      %v318 = vld [vmem:[%s2 + $0x14] sm:$0xf]
      %v319 = vld [vmem:[%s2 + $0x18] sm:$0xf]
      %v320 = vld [vmem:[%s2 + $0x1c] sm:$0xf]
      %v321 = vld [vmem:[%s2 + $0x20] sm:$0xf]
      %v322 = vld [vmem:[%s2 + $0x24] sm:$0xf]
      %v323 = vld [vmem:[%s2 + $0x28] sm:$0xf]
      %v324 = vld [vmem:[%s2 + $0x2c] sm:$0xf]
      %v325 = vld [vmem:[%s2 + $0x30] sm:$0xf]
      %v326 = vld [vmem:[%s2 + $0x34] sm:$0xf]
      %v327 = vld [vmem:[%s2 + $0x38] sm:$0xf]
      %v328 = vld [vmem:[%s2 + $0x3c] sm:$0xf]
      %v329 = vld [vmem:[%s2 + $0x40] sm:$0xf]
      %v330 = vld [vmem:[%s2 + $0x44] sm:$0xf]
      %v331 = vld [vmem:[%s2 + $0x48] sm:$0xf]
      %v332 = vld [vmem:[%s2 + $0x4c] sm:$0xf]
      %v333 = vld [vmem:[%s2 + $0x50] sm:$0xf]
      %v334 = vld [vmem:[%s2 + $0x54] sm:$0xf]
      %v335 = vld [vmem:[%s2 + $0x58] sm:$0xf]
      %v336 = vld [vmem:[%s2 + $0x5c] sm:$0xf]
      %v337 = vld [vmem:[%s2 + $0x60] sm:$0xf]
      %v338 = vld [vmem:[%s2 + $0x64] sm:$0xf]
      %v339 = vld [vmem:[%s2 + $0x68] sm:$0xf]
      %v340 = vld [vmem:[%s2 + $0x6c] sm:$0xf]
      %v341 = vld [vmem:[%s2 + $0x70] sm:$0xf]
      %v342 = vld [vmem:[%s2 + $0x74] sm:$0xf]
      %v343 = vld [vmem:[%s2 + $0x78] sm:$0xf]
      %v344 = vld [vmem:[%s2 + $0x7c] sm:$0xf]
      %v345 = vld [vmem:[%s2 + $0x80] sm:$0xf]
      %v346 = vld [vmem:[%s2 + $0x84] sm:$0xf]
      %v347 = vld [vmem:[%s2 + $0x88] sm:$0xf]
      %v348 = vld [vmem:[%s2 + $0x8c] sm:$0xf]
      %v349 = vld [vmem:[%s2 + $0x90] sm:$0xf]
      %v350 = vld [vmem:[%s2 + $0x94] sm:$0xf]
      %v351 = vld [vmem:[%s2 + $0x98] sm:$0xf]
      %v352 = vld [vmem:[%s2 + $0x9c] sm:$0xf]
      %v353 = vld [vmem:[%s2 + $0xa0] sm:$0xf]
      %v354 = vld [vmem:[%s2 + $0xa4] sm:$0xf]
      %v355 = vld [vmem:[%s2 + $0xa8] sm:$0xf]
      %v356 = vld [vmem:[%s2 + $0xac] sm:$0xf]
      %v357 = vld [vmem:[%s2 + $0xb0] sm:$0xf]
      %v358 = vld [vmem:[%s2 + $0xb4] sm:$0xf]
      %v359 = vld [vmem:[%s2 + $0xb8] sm:$0xf]
      %v360 = vld [vmem:[%s2 + $0xbc] sm:$0xf]
      %v361 = vld [vmem:[%s3] sm:$0xff]
      %v362 = vld [vmem:[%s3 + $0x8] sm:$0xff]
      %v411 = vunpack.c.l.b16 %v313
      %v412 = vunpack.c.l.b16 %v314
      %v413 = vunpack.c.l.b16 %v315
      %v414 = vunpack.c.l.b16 %v316
      %v415 = vunpack.c.l.b16 %v317
      %v416 = vunpack.c.l.b16 %v318
      %v417 = vunpack.c.l.b16 %v319
      %v418 = vunpack.c.l.b16 %v320
      %v419 = vunpack.c.l.b16 %v321
      %v420 = vunpack.c.l.b16 %v322
      %v421 = vunpack.c.l.b16 %v323
      %v422 = vunpack.c.l.b16 %v324
      %v423 = vunpack.c.l.b16 %v325
      %v424 = vunpack.c.l.b16 %v326
      %v425 = vunpack.c.l.b16 %v327
      %v426 = vunpack.c.l.b16 %v328
      %v427 = vunpack.c.l.b16 %v329
      %v428 = vunpack.c.l.b16 %v330
      %v429 = vunpack.c.l.b16 %v331
      %v430 = vunpack.c.l.b16 %v332
      %v431 = vunpack.c.l.b16 %v333
      %v432 = vunpack.c.l.b16 %v334
      %v433 = vunpack.c.l.b16 %v335
      %v434 = vunpack.c.l.b16 %v336
      %v435 = vunpack.c.l.b16 %v337
      %v436 = vunpack.c.l.b16 %v338
      %v437 = vunpack.c.l.b16 %v339
      %v438 = vunpack.c.l.b16 %v340
      %v439 = vunpack.c.l.b16 %v341
      %v440 = vunpack.c.l.b16 %v342
      %v441 = vunpack.c.l.b16 %v343
      %v442 = vunpack.c.l.b16 %v344
      %v443 = vunpack.c.l.b16 %v345
      %v444 = vunpack.c.l.b16 %v346
      %v445 = vunpack.c.l.b16 %v347
      %v446 = vunpack.c.l.b16 %v348
      %v447 = vunpack.c.l.b16 %v349
      %v448 = vunpack.c.l.b16 %v350
      %v449 = vunpack.c.l.b16 %v351
      %v450 = vunpack.c.l.b16 %v352
      %v451 = vunpack.c.l.b16 %v353
      %v452 = vunpack.c.l.b16 %v354
      %v453 = vunpack.c.l.b16 %v355
      %v454 = vunpack.c.l.b16 %v356
      %v455 = vunpack.c.l.b16 %v357
      %v456 = vunpack.c.l.b16 %v358
      %v457 = vunpack.c.l.b16 %v359
      %v458 = vunpack.c.l.b16 %v360
      %v459 = vpack.c.b16 %v412, %v411
      %v460 = vpack.c.b16 %v414, %v413
      %v461 = vpack.c.b16 %v416, %v415
      %v462 = vpack.c.b16 %v418, %v417
      %v463 = vpack.c.b16 %v420, %v419
      %v464 = vpack.c.b16 %v422, %v421
      %v465 = vpack.c.b16 %v424, %v423
      %v466 = vpack.c.b16 %v426, %v425
      %v467 = vpack.c.b16 %v428, %v427
      %v468 = vpack.c.b16 %v430, %v429
      %v469 = vpack.c.b16 %v432, %v431
      %v470 = vpack.c.b16 %v434, %v433
      %v471 = vpack.c.b16 %v436, %v435
      %v472 = vpack.c.b16 %v438, %v437
      %v473 = vpack.c.b16 %v440, %v439
      %v474 = vpack.c.b16 %v442, %v441
      %v475 = vpack.c.b16 %v444, %v443
      %v476 = vpack.c.b16 %v446, %v445
      %v477 = vpack.c.b16 %v448, %v447
      %v478 = vpack.c.b16 %v450, %v449
      %v479 = vpack.c.b16 %v452, %v451
      %v480 = vpack.c.b16 %v454, %v453
      %v481 = vpack.c.b16 %v456, %v455
      %v482 = vpack.c.b16 %v458, %v457
      %507 = vmatpush.bf16.msra.mxu0 %v466
      %508 = vmatpush.bf16.msra.mxu0 %v465
      %509 = vmatpush.bf16.msra.mxu0 %v464
      %510 = vmatpush.bf16.msra.mxu0 %v463
      %511 = vmatpush.bf16.msra.mxu0 %v462
      %512 = vmatpush.bf16.msra.mxu0 %v461
      %513 = vmatpush.bf16.msra.mxu0 %v460
      %514 = vmatpush.bf16.msra.mxu0 %v459
      %515 = vmatmul.bf16.gmra.mxu0 %v310
      %v516 = vpop.f32.mrf.mxu0
      %v517 = vadd.f32 %v361, %v516
      %v518 = vpop.f32.mrf.mxu0
      %v519 = vadd.f32 %v362, %v518
      %520 = vdwg.mxu0
      %521 = vmatpush.bf16.msra.mxu0 %v474
      %522 = vmatpush.bf16.msra.mxu0 %v473
      %523 = vmatpush.bf16.msra.mxu0 %v472
      %524 = vmatpush.bf16.msra.mxu0 %v471
      %525 = vmatpush.bf16.msra.mxu0 %v470
      %526 = vmatpush.bf16.msra.mxu0 %v469
      %527 = vmatpush.bf16.msra.mxu0 %v468
      %528 = vmatpush.bf16.msra.mxu0 %v467
      %529 = vmatmul.bf16.gmra.mxu0 %v311
      %v530 = vpop.f32.mrf.mxu0
      %v531 = vadd.f32 %v517, %v530
      %v532 = vpop.f32.mrf.mxu0
      %v533 = vadd.f32 %v519, %v532
      %534 = vdwg.mxu0
      %535 = vmatpush.bf16.msra.mxu0 %v482
      %536 = vmatpush.bf16.msra.mxu0 %v481
      %537 = vmatpush.bf16.msra.mxu0 %v480
      %538 = vmatpush.bf16.msra.mxu0 %v479
      %539 = vmatpush.bf16.msra.mxu0 %v478
      %540 = vmatpush.bf16.msra.mxu0 %v477
      %541 = vmatpush.bf16.msra.mxu0 %v476
      %542 = vmatpush.bf16.msra.mxu0 %v475
      %543 = vmatmul.bf16.gmra.mxu0 %v312
      %v544 = vpop.f32.mrf.mxu0
      %v545 = vadd.f32 %v531, %v544
      %v546 = vpop.f32.mrf.mxu0
      %v547 = vadd.f32 %v533, %v546
      %548 = vdwg.mxu0
      %v549 = vmax.f32 %v545, 0.0
      %v550 = vmax.f32 %v547, 0.0
      %553 = vrot.lane.b32.xlu0 %v549, 16
      %v554 = vpop.permute.xlu0 %553
      %555 = vrot.lane.b32.xlu0 %v550, 16
      %v556 = vpop.permute.xlu0 %555
      %vm559 = vcmask 130048
      %v560 = vsel %vm559, 0.0, %v554
      %v561 = vsel %vm559, 0.0, %v556
      %562 = vrot.lane.b32.xlu0 %v549, 112
      %v563 = vpop.permute.xlu0 %562
      %564 = vrot.lane.b32.xlu0 %v550, 112
      %v565 = vpop.permute.xlu0 %564
      %vm568 = vcmask 916480
      %v569 = vsel %vm568, %v563, 0.0
      %v570 = vsel %vm568, %v565, 0.0
      %v571 = vld [vmem:[%s4] sm:$0xff]
      %v572 = vld [vmem:[%s4 + $0x8] sm:$0xff]
      %v573 = vld [vmem:[%s5] sm:$0xff]
      %v574 = vld [vmem:[%s5 + $0x8] sm:$0xff]
      %576 = vset.pattern.permute.xlu0 0
      %577 = vperm.xlu0 %576, %v573
      %v578 = vpop.permute.xlu0 %577
      %581 = vset.pattern.permute.xlu0 0
      %582 = vperm.xlu0 %581, %v574
      %v583 = vpop.permute.xlu0 %582
      %vm585 = vcmask 457728
      %v587 = vsel %vm585, %v571, 0
      %v590 = vsel %vm585, %v572, 0
      %592 = vmatpush.msra.mxu0 0.0
      %593 = vmatpush.msra.mxu0 0.0
      %594 = vmatpush.msra.mxu0 0.0
      %595 = vmatpush.msra.mxu0 0.0
      %596 = vmatpush.msra.mxu0 0.0
      %597 = vmatpush.msra.mxu0 0.0
      %598 = vmatpush.msra.mxu0 0.0
      %599 = vmatpush.msra.mxu0 0.0
      %600 = vmatpush.msra.mxu0 0.0
      %601 = vmatpush.msra.mxu0 %v249
      %602 = vmatpush.msra.mxu0 %v570
      %603 = vmatpush.msra.mxu0 %v569
      %604 = vmatpush.msra.mxu0 %v550
      %605 = vmatpush.msra.mxu0 %v549
      %606 = vmatpush.msra.mxu0 %v561
      %607 = vmatpush.msra.mxu0 %v560
      %608 = vmatmul.f32.gmra.mxu0 %v587
      %v609 = vpop.f32.mrf.mxu0
      %v610 = vadd.f32 %v578, %v609
      %611 = vmatmul.f32.gmra.mxu0 %v590
      %v612 = vpop.f32.mrf.mxu0
      %v613 = vadd.f32 %v583, %v612
      %614 = vdwg.mxu0
      %v615 = vmax.f32 %v610, 0.0
      %v616 = vmax.f32 %v613, 0.0
      %617 = vst [vmem:[%s248] sm:$0xff] %v615
      %618 = vst [vmem:[%s248 + $0x8] sm:$0xff] %v616
      %p619 = scmp.lt.s32.totalorder %s17, 1
      %s620 = scalar_select %p619, %s17, 1
      %s621 = smul.addr %s620, 2
      %s622 = smul.addr %s621, 8
      %s623 = scalar_lea.vmem %s6, %s622
      // Predicated region
      $region45: #{st_gcn_block_forward.1} parent=43 // pred_check
        %p624 = pneg %p166
      $region46: #{st_gcn_block_forward.1} parent=43 // pred_check_branch
        %626 = sbr.rel (%p624) target = $region48
      $region47: #{st_gcn_block_forward.1} parent=43 // pred_region
        _
      $region48: #{st_gcn_block_forward.1} parent=43 // pred_fallthru
        _
    $region44: #{st_gcn_block_forward.1} parent=5 // pred_fallthru
      _
    %p627 = scmp.le.s32.totalorder 2, %s12
    // Predicated region
    $region49: #{st_gcn_block_forward.1} parent=5 // pred_check
      %p628 = pneg %p627
    $region50: #{st_gcn_block_forward.1} parent=5 // pred_check_branch
      %630 = sbr.rel (%p628) target = $region52
    $region51: #{st_gcn_block_forward.1} parent=5 // pred_region
      %s631 = ssub.s32 %s12, 2
      // Predicated region
      $region53: #{st_gcn_block_forward.1} parent=51 // pred_check
        %p632 = pneg %p172
      $region54: #{st_gcn_block_forward.1} parent=51 // pred_check_branch
        %634 = sbr.rel (%p632) target = $region56
      $region55: #{st_gcn_block_forward.1} parent=51 // pred_region
        %p635 = scmp.lt.s32.totalorder %s18, 1
        %s636 = scalar_select %p635, %s18, 1
        %s637 = smul.addr %s636, 2
        %s638 = smul.addr %s637, 8
        %s639 = scalar_lea.vmem %s6, %s638
      $region56: #{st_gcn_block_forward.1} parent=51 // pred_fallthru
        _
    $region52: #{st_gcn_block_forward.1} parent=5 // pred_fallthru
      _
  $region6: #{st_gcn_block_forward.1} parent=0 // loop_footer
    %s16 = sadd.s32 1, %s12
  $region7: #{st_gcn_block_forward.1} parent=0 // loop_footer_branch
    %11 = sbr.rel target = $region3
  $region8: #{st_gcn_block_forward.1} parent=0 // loop_exit
    _

</llo_original>
